<compile_context>
chip_gen: v6e
topology: v6e:2x2x1
jax: 0.10.0
libtpu: 0.0.40
codegen_flags: <defaults>
</compile_context>

<pallas_src>
import functools

import jax
import jax.numpy as jnp
import numpy as np
from jax.experimental import pallas as pl
from jax.experimental.pallas import tpu as pltpu

_LANE = 128


def _round_up(x, m):
    return ((x + m - 1) // m) * m


def _cdiv(a, b):
    return (a + b - 1) // b


# ----------------------------- capability probes -----------------------------
def _probe_buffered():
    try:
        pl.BlockSpec((8, _LANE), lambda i: (0, 0), pipeline_mode=pl.Buffered(1))
        return True
    except Exception:
        return False


_HAS_BUFFERED = _probe_buffered()


def _vmem_limits():
    """Generation-aware VMEM numbers: (planning budget, Mosaic scoped limit)."""
    cap = 64 * 1024 * 1024  # conservative default (v7x per-TC size)
    try:
        info = pltpu.get_tpu_info()
        cap = int(getattr(info, "vmem_capacity_bytes", cap)) or cap
    except Exception:
        pass
    budget = int(cap * 0.55)   # what the tile planner targets
    limit = int(cap * 0.80)    # scoped-VMEM limit (headroom for compiler scratch)
    return budget, limit


# --------------------------------- kernels ------------------------------------
def _make_resident_kernel(hid_chunk, n_chunks):
    """Whole MLP per batch tile, weights resident in VMEM.  The hidden activation
    is computed in `hid_chunk`-wide slabs so the f32 intermediate stays small."""

    def kernel(x_ref, w1_ref, b1_ref, w2_ref, b2_ref, o_ref):
        x = x_ref[...]
        y = jnp.zeros((x.shape[0], o_ref.shape[-1]), jnp.float32)
        for c in range(n_chunks):                      # static, unrolled
            lo = c * hid_chunk
            h = jnp.dot(x, w1_ref[:, lo:lo + hid_chunk],
                        preferred_element_type=jnp.float32)
            h = jnp.maximum(h + b1_ref[:, lo:lo + hid_chunk].astype(jnp.float32), 0.0)
            y = y + jnp.dot(h.astype(w2_ref.dtype), w2_ref[lo:lo + hid_chunk, :],
                            preferred_element_type=jnp.float32)
        o_ref[...] = (y + b2_ref[...].astype(jnp.float32)).astype(o_ref.dtype)

    return kernel


def _streamed_kernel(x_ref, w1_ref, b1_ref, w2_ref, b2_ref, o_ref, acc_ref):
    """Fallback when weights don't fit in VMEM: stream hidden-dim blocks of
    W1/W2 through VMEM, accumulate output in an f32 scratch (reduction axis last)."""
    k = pl.program_id(1)

    @pl.when(k == 0)
    def _():
        acc_ref[...] = jnp.zeros_like(acc_ref)

    h = jnp.dot(x_ref[...], w1_ref[...], preferred_element_type=jnp.float32)
    h = jnp.maximum(h + b1_ref[...].astype(jnp.float32), 0.0)
    acc_ref[...] += jnp.dot(h.astype(w2_ref.dtype), w2_ref[...],
                            preferred_element_type=jnp.float32)

    @pl.when(k == pl.num_programs(1) - 1)
    def _():
        o_ref[...] = (acc_ref[...] + b2_ref[...].astype(jnp.float32)).astype(o_ref.dtype)


# ------------------------------ spec / planning -------------------------------
def _resident_spec(shape, use_single_buffer):
    index_map = lambda *_: (0,) * len(shape)
    if use_single_buffer and _HAS_BUFFERED:
        # Constant index_map => never re-DMA'd; one buffer halves the footprint.
        return pl.BlockSpec(shape, index_map, pipeline_mode=pl.Buffered(1))
    return pl.BlockSpec(shape, index_map)


def _plan_resident(batch, in_p, hid_p, out_p, act_bytes, out_bytes, sublane,
                   budget, wbuf):
    """Returns (tile_m, n_m_tiles, hid_chunk) or None if weights can't stay resident."""
    hid_chunk = next(c for c in (512, 256, 128) if hid_p % c == 0)
    weights = wbuf * ((in_p * hid_p + hid_p * out_p) * act_bytes + (hid_p + out_p) * 4)

    def fits(tm):
        acts = 2 * tm * in_p * act_bytes + 2 * tm * out_p * out_bytes
        interm = tm * hid_chunk * 4 + tm * out_p * 4 + tm * hid_chunk * act_bytes
        return weights + acts + interm <= budget

    if not fits(sublane):
        return None
    cap = _round_up(1024, sublane)
    while cap > sublane and not fits(cap):
        cap = max(sublane, _round_up(cap // 2, sublane))
    # Minimize batch padding; >=2 grid tiles so a 2-TC part (v7x) splits the work.
    min_tiles = 2 if batch > sublane else 1
    n_m = max(_cdiv(batch, cap), min_tiles)
    tile_m = _round_up(_cdiv(batch, n_m), sublane)
    return tile_m, n_m, hid_chunk


def _plan_streamed(batch, in_p, hid_p, out_p, act_bytes, out_bytes, sublane, budget):
    """Returns (tile_m, n_m_tiles, tile_h) for the hidden-streamed fallback."""

    def fits(tm, th):
        wts = 2 * (in_p * th + th * out_p) * act_bytes + 2 * th * 4 + out_p * 4
        acts = 2 * tm * in_p * act_bytes + 2 * tm * out_p * out_bytes
        scr = tm * out_p * 4 + tm * th * 4 + tm * th * act_bytes
        return wts + acts + scr <= budget

    tile_m = _round_up(min(512, max(batch, sublane)), sublane)
    while tile_m > sublane and not fits(tile_m, _LANE):
        tile_m = max(sublane, _round_up(tile_m // 2, sublane))
    th_cands = [t for t in range(min(hid_p, 2048), 0, -_LANE) if hid_p % t == 0]
    tile_h = next((t for t in th_cands if fits(tile_m, t)), _LANE)
    min_tiles = 2 if batch > sublane else 1
    n_m = max(_cdiv(batch, tile_m), min_tiles)
    tile_m = _round_up(_cdiv(batch, n_m), sublane)
    return tile_m, n_m, tile_h


# -------------------------------- public API -----------------------------------
def prepare_mlp_params(w1, b1, w2, b2, compute_dtype=jnp.float32):
    """Pad/cast the weights ONCE (hoisted out of the per-call hot path).
    w1: (in, hid), w2: (hid, out) -- transposed vs. PyTorch nn.Linear storage,
    so the forward is y = relu(x @ W1 + b1) @ W2 + b2.  Returns (params, out_dim)."""
    in_dim, hid_dim = w1.shape
    out_dim = w2.shape[1]
    cdt = jnp.dtype(compute_dtype)
    in_p, hid_p, out_p = (_round_up(d, _LANE) for d in (in_dim, hid_dim, out_dim))
    w1p = jnp.zeros((in_p, hid_p), cdt).at[:in_dim, :hid_dim].set(w1.astype(cdt))
    b1p = jnp.zeros((1, hid_p), jnp.float32).at[:, :hid_dim].set(
        jnp.reshape(b1, (1, -1)).astype(jnp.float32))
    w2p = jnp.zeros((hid_p, out_p), cdt).at[:hid_dim, :out_dim].set(w2.astype(cdt))
    b2p = jnp.zeros((1, out_p), jnp.float32).at[:, :out_dim].set(
        jnp.reshape(b2, (1, -1)).astype(jnp.float32))
    return (w1p, b1p, w2p, b2p), out_dim


@functools.partial(
    jax.jit,
    static_argnames=("out_dim", "out_dtype", "vmem_budget_bytes", "single_buffer_weights"))
def mlp_forward_padded(x, w1p, b1p, w2p, b2p, *, out_dim, out_dtype=None,
                       vmem_budget_bytes=None, single_buffer_weights=True):
    """Hot path: x (B, in_dim) + pre-padded params -> relu(x@W1+b1)@W2+b2."""
    batch, in_dim = x.shape
    in_p, hid_p = w1p.shape
    out_p = w2p.shape[1]
    cdt = w1p.dtype
    act_bytes = jnp.dtype(cdt).itemsize
    odt = jnp.dtype(out_dtype) if out_dtype is not None else x.dtype
    out_bytes = odt.itemsize
    sublane = 8 if act_bytes >= 4 else 16

    budget, vmem_limit = _vmem_limits()
    if vmem_budget_bytes is not None:          # for testing / explicit override
        budget = int(vmem_budget_bytes)

    use_sb = single_buffer_weights and _HAS_BUFFERED
    wbuf = 1 if use_sb else 2

    plan = _plan_resident(batch, in_p, hid_p, out_p, act_bytes, out_bytes,
                          sublane, budget, wbuf)
    if plan is not None:
        tile_m, n_m, hid_chunk = plan
    else:
        tile_m, n_m, tile_h = _plan_streamed(batch, in_p, hid_p, out_p,
                                             act_bytes, out_bytes, sublane, budget)
    batch_p = tile_m * n_m

    # Skip activation padding when it is a no-op.
    if batch_p == batch and in_p == in_dim:
        xp = x if x.dtype == cdt else x.astype(cdt)
    else:
        xp = jnp.zeros((batch_p, in_p), cdt).at[:batch, :in_dim].set(x.astype(cdt))

    flops = 2 * batch_p * (in_p * hid_p + hid_p * out_p)
    bytes_accessed = ((batch_p * in_p + in_p * hid_p + hid_p * out_p) * act_bytes
                      + (hid_p + out_p) * 4 + batch_p * out_p * out_bytes)
    cost = pl.CostEstimate(flops=flops, bytes_accessed=bytes_accessed, transcendentals=0)

    if plan is not None:
        out_padded = pl.pallas_call(
            _make_resident_kernel(hid_chunk, hid_p // hid_chunk),
            out_shape=jax.ShapeDtypeStruct((batch_p, out_p), odt),
            grid=(n_m,),
            in_specs=[
                pl.BlockSpec((tile_m, in_p), lambda i: (i, 0)),   # x streamed per tile
                _resident_spec((in_p, hid_p), use_sb),            # w1 resident
                _resident_spec((1, hid_p), use_sb),               # b1 resident
                _resident_spec((hid_p, out_p), use_sb),           # w2 resident
                _resident_spec((1, out_p), use_sb),               # b2 resident
            ],
            out_specs=pl.BlockSpec((tile_m, out_p), lambda i: (i, 0)),
            compiler_params=pltpu.CompilerParams(
                dimension_semantics=("parallel",),
                vmem_limit_bytes=vmem_limit),
            cost_estimate=cost,
        )(xp, w1p, b1p, w2p, b2p)
    else:
        n_h = hid_p // tile_h
        out_padded = pl.pallas_call(
            _streamed_kernel,
            out_shape=jax.ShapeDtypeStruct((batch_p, out_p), odt),
            grid=(n_m, n_h),
            in_specs=[
                pl.BlockSpec((tile_m, in_p), lambda i, k: (i, 0)),
                pl.BlockSpec((in_p, tile_h), lambda i, k: (0, k)),
                pl.BlockSpec((1, tile_h), lambda i, k: (0, k)),
                pl.BlockSpec((tile_h, out_p), lambda i, k: (k, 0)),
                _resident_spec((1, out_p), use_sb),
            ],
            out_specs=pl.BlockSpec((tile_m, out_p), lambda i, k: (i, 0)),
            scratch_shapes=[pltpu.VMEM((tile_m, out_p), jnp.float32)],
            compiler_params=pltpu.CompilerParams(
                dimension_semantics=("parallel", "arbitrary"),
                vmem_limit_bytes=vmem_limit),
            cost_estimate=cost,
        )(xp, w1p, b1p, w2p, b2p)

    if batch_p != batch or out_p != out_dim:
        out_padded = out_padded[:batch, :out_dim]
    return out_padded


def mlp_forward(x, w1, b1, w2, b2, compute_dtype=jnp.float32, **kwargs):
    """Convenience one-shot wrapper (pads weights per call; prefer prepare_mlp_params
    + mlp_forward_padded when calling repeatedly)."""
    params, out_dim = prepare_mlp_params(w1, b1, w2, b2, compute_dtype)
    return mlp_forward_padded(x, *params, out_dim=out_dim, **kwargs)


def init_mlp_params(key, in_dim, hid_dim, out_dim, dtype=jnp.float32):
    """Deterministic init mimicking PyTorch nn.Linear default (U(+-1/sqrt(fan_in)))."""
    k1, k2, k3, k4 = jax.random.split(key, 4)
    bound1 = 1.0 / (in_dim ** 0.5)
    bound2 = 1.0 / (hid_dim ** 0.5)
    w1 = jax.random.uniform(k1, (in_dim, hid_dim), dtype, -bound1, bound1)
    b1 = jax.random.uniform(k2, (1, hid_dim), dtype, -bound1, bound1)
    w2 = jax.random.uniform(k3, (hid_dim, out_dim), dtype, -bound2, bound2)
    b2 = jax.random.uniform(k4, (1, out_dim), dtype, -bound2, bound2)
    return w1, b1, w2, b2


if __name__ == "__main__":
    key = jax.random.PRNGKey(0)

    def run(x, params, out_dim, **kw):
        try:
            return jax.block_until_ready(
                mlp_forward_padded(x, *params, out_dim=out_dim, **kw))
        except Exception:
            if not _HAS_BUFFERED:
                raise
            # Fallback: single-buffered resident specs unsupported -> double-buffer.
            return jax.block_until_ready(
                mlp_forward_padded(x, *params, out_dim=out_dim,
                                   single_buffer_weights=False, **kw))

    # --- Test 1: small shapes matching the module spec (f32 path). -----------
    batch, in_dim, hid_dim, out_dim = 8, 32, 64, 16
    kx, kp, key = jax.random.split(key, 3)
    x = jax.random.normal(kx, (batch, in_dim), jnp.float32)
    w1, b1, w2, b2 = init_mlp_params(kp, in_dim, hid_dim, out_dim)
    params, od = prepare_mlp_params(w1, b1, w2, b2, jnp.float32)
    out = run(x, params, od)

    xn, w1n, b1n, w2n, b2n = (np.asarray(a, np.float64) for a in (x, w1, b1, w2, b2))
    ref = np.maximum(xn @ w1n + b1n, 0.0) @ w2n + b2n
    assert out.shape == (batch, out_dim)
    # Tolerance accounts for MXU f32 matmuls possibly using bf16 passes internally.
    np.testing.assert_allclose(np.asarray(out, np.float64), ref, atol=1e-2, rtol=1e-2)

    # --- Test 2: larger shapes, bf16 operands (f32 accumulation), multi-chunk hid. ---
    bs2, i2, h2, o2 = 256, 256, 384, 128
    kx2, kp2, key = jax.random.split(key, 3)
    x2 = jax.random.normal(kx2, (bs2, i2), jnp.float32)
    w1b, b1b, w2b, b2b = init_mlp_params(kp2, i2, h2, o2)
    params2, od2 = prepare_mlp_params(w1b, b1b, w2b, b2b, jnp.bfloat16)
    out2 = run(x2, params2, od2)

    def _bf(a):  # mirror the kernel's bf16 cast points in the reference
        return np.asarray(jnp.asarray(a, jnp.float32).astype(jnp.bfloat16)
                          .astype(jnp.float32), np.float64)

    h_ref = np.maximum(_bf(x2) @ _bf(w1b) + np.asarray(b1b, np.float64), 0.0)
    ref2 = _bf(h_ref) @ _bf(w2b) + np.asarray(b2b, np.float64)
    assert out2.shape == (bs2, o2)
    np.testing.assert_allclose(np.asarray(out2, np.float64), ref2, atol=3e-2, rtol=3e-2)

    # --- Test 3: force the streamed (weights-don't-fit-VMEM) fallback path. ---
    bs3, i3, h3, o3 = 64, 256, 512, 256
    kx3, kp3, key = jax.random.split(key, 3)
    x3 = jax.random.normal(kx3, (bs3, i3), jnp.float32)
    w13, b13, w23, b23 = init_mlp_params(kp3, i3, h3, o3)
    params3, od3 = prepare_mlp_params(w13, b13, w23, b23, jnp.float32)
    out3 = run(x3, params3, od3, vmem_budget_bytes=1 << 20)  # 1 MiB -> streamed path

    xn3, w1n3, b1n3, w2n3, b2n3 = (np.asarray(a, np.float64)
                                   for a in (x3, w13, b13, w23, b23))
    ref3 = np.maximum(xn3 @ w1n3 + b1n3, 0.0) @ w2n3 + b2n3
    assert out3.shape == (bs3, o3)
    np.testing.assert_allclose(np.asarray(out3, np.float64), ref3, atol=1e-2, rtol=1e-2)

    print("KERNEL_OK")
</pallas_src>

<mosaic_0001>
module attributes {stable_mosaic.version = 11 : i64} {
  func.func @kernel(%arg0: i32, %arg1: memref<8x128xf32, #tpu.memory_space<vmem>>, %arg2: memref<128x128xf32, #tpu.memory_space<vmem>>, %arg3: memref<1x128xf32, #tpu.memory_space<vmem>>, %arg4: memref<128x128xf32, #tpu.memory_space<vmem>>, %arg5: memref<1x128xf32, #tpu.memory_space<vmem>>, %arg6: memref<8x128xf32, #tpu.memory_space<vmem>>) attributes {dimension_semantics = [#tpu.dimension_semantics<parallel>], iteration_bounds = array<i64: 1>, scalar_prefetch = 0 : i64, scratch_operands = 0 : i64, tpu.core_type = #tpu.core_type<tc>, window_params = [{transform_indices = @transform_0, window_bounds = array<i64: 8, 128>}, {pipeline_mode = #tpu.pipeline_mode<synchronous>, transform_indices = @transform_1, window_bounds = array<i64: 128, 128>}, {pipeline_mode = #tpu.pipeline_mode<synchronous>, transform_indices = @transform_2, window_bounds = array<i64: 1, 128>}, {pipeline_mode = #tpu.pipeline_mode<synchronous>, transform_indices = @transform_3, window_bounds = array<i64: 128, 128>}, {pipeline_mode = #tpu.pipeline_mode<synchronous>, transform_indices = @transform_4, window_bounds = array<i64: 1, 128>}, {transform_indices = @transform_5, window_bounds = array<i64: 8, 128>}]} {
    %c0 = arith.constant 0 : index
    %c0_0 = arith.constant 0 : index
    %0 = vector.load %arg1[%c0, %c0_0] : memref<8x128xf32, #tpu.memory_space<vmem>>, vector<8x128xf32>
    %cst = arith.constant 0.000000e+00 : f32
    %1 = vector.broadcast %cst : f32 to vector<8x128xf32>
    %c0_1 = arith.constant 0 : index
    %c0_2 = arith.constant 0 : index
    %2 = vector.load %arg2[%c0_1, %c0_2] : memref<128x128xf32, #tpu.memory_space<vmem>>, vector<128x128xf32>
    %cst_3 = arith.constant dense<0.000000e+00> : vector<8x128xf32>
    %3 = tpu.matmul %0, %2, %cst_3 {dimension_numbers = #tpu.dot_dimension_numbers<[1], [0], [0], [1], [0, 0, 1, 1], [], []>} : vector<8x128xf32>, vector<128x128xf32>, vector<8x128xf32> -> vector<8x128xf32>
    %c0_4 = arith.constant 0 : index
    %c0_5 = arith.constant 0 : index
    %4 = vector.load %arg3[%c0_4, %c0_5] : memref<1x128xf32, #tpu.memory_space<vmem>>, vector<1x128xf32>
    %5 = vector.broadcast %4 : vector<1x128xf32> to vector<8x128xf32>
    %6 = arith.addf %3, %5 : vector<8x128xf32>
    %cst_6 = arith.constant 0.000000e+00 : f32
    %7 = vector.broadcast %cst_6 : f32 to vector<8x128xf32>
    %8 = arith.maximumf %6, %7 : vector<8x128xf32>
    %c0_7 = arith.constant 0 : index
    %c0_8 = arith.constant 0 : index
    %9 = vector.load %arg4[%c0_7, %c0_8] : memref<128x128xf32, #tpu.memory_space<vmem>>, vector<128x128xf32>
    %cst_9 = arith.constant dense<0.000000e+00> : vector<8x128xf32>
    %10 = tpu.matmul %8, %9, %cst_9 {dimension_numbers = #tpu.dot_dimension_numbers<[1], [0], [0], [1], [0, 0, 1, 1], [], []>} : vector<8x128xf32>, vector<128x128xf32>, vector<8x128xf32> -> vector<8x128xf32>
    %11 = arith.addf %1, %10 : vector<8x128xf32>
    %c0_10 = arith.constant 0 : index
    %c0_11 = arith.constant 0 : index
    %12 = vector.load %arg5[%c0_10, %c0_11] : memref<1x128xf32, #tpu.memory_space<vmem>>, vector<1x128xf32>
    %13 = vector.broadcast %12 : vector<1x128xf32> to vector<8x128xf32>
    %14 = arith.addf %11, %13 : vector<8x128xf32>
    %c0_12 = arith.constant 0 : index
    %c0_13 = arith.constant 0 : index
    %15 = vector.load %arg6[%c0_12, %c0_13] : memref<8x128xf32, #tpu.memory_space<vmem>>, vector<8x128xf32>
    tpu.vector_store %arg6[%c0_12, %c0_13], %14 {strides = array<i32>} : memref<8x128xf32, #tpu.memory_space<vmem>>, vector<8x128xf32>,
    return
  }
  func.func @transform_0(%arg0: i32) -> (i32, i32) {
    %c0_i32 = arith.constant 0 : i32
    %c0_i32_0 = arith.constant 0 : i32
    return %arg0, %c0_i32 : i32, i32
  }
  func.func @transform_1(%arg0: i32) -> (i32, i32) {
    %c0_i32 = arith.constant 0 : i32
    %c0_i32_0 = arith.constant 0 : i32
    %c0_i32_1 = arith.constant 0 : i32
    return %c0_i32, %c0_i32_0 : i32, i32
  }
  func.func @transform_2(%arg0: i32) -> (i32, i32) {
    %c0_i32 = arith.constant 0 : i32
    %c0_i32_0 = arith.constant 0 : i32
    %c0_i32_1 = arith.constant 0 : i32
    return %c0_i32, %c0_i32_0 : i32, i32
  }
  func.func @transform_3(%arg0: i32) -> (i32, i32) {
    %c0_i32 = arith.constant 0 : i32
    %c0_i32_0 = arith.constant 0 : i32
    %c0_i32_1 = arith.constant 0 : i32
    return %c0_i32, %c0_i32_0 : i32, i32
  }
  func.func @transform_4(%arg0: i32) -> (i32, i32) {
    %c0_i32 = arith.constant 0 : i32
    %c0_i32_0 = arith.constant 0 : i32
    %c0_i32_1 = arith.constant 0 : i32
    return %c0_i32, %c0_i32_0 : i32, i32
  }
  func.func @transform_5(%arg0: i32) -> (i32, i32) {
    %c0_i32 = arith.constant 0 : i32
    %c0_i32_0 = arith.constant 0 : i32
    return %arg0, %c0_i32 : i32, i32
  }
}

module attributes {stable_mosaic.version = 11 : i64} {
  func.func @kernel(%arg0: i32, %arg1: memref<8x128xf32, #tpu.memory_space<vmem>>, %arg2: memref<128x128xf32, #tpu.memory_space<vmem>>, %arg3: memref<1x128xf32, #tpu.memory_space<vmem>>, %arg4: memref<128x128xf32, #tpu.memory_space<vmem>>, %arg5: memref<1x128xf32, #tpu.memory_space<vmem>>, %arg6: memref<8x128xf32, #tpu.memory_space<vmem>>) attributes {dimension_semantics = [#tpu.dimension_semantics<parallel>], iteration_bounds = array<i64: 1>, scalar_prefetch = 0 : i64, scratch_operands = 0 : i64, tpu.core_type = #tpu.core_type<tc>, window_params = [{transform_indices = @transform_0, window_bounds = array<i64: 8, 128>}, {pipeline_mode = #tpu.pipeline_mode<synchronous>, transform_indices = @transform_1, window_bounds = array<i64: 128, 128>}, {pipeline_mode = #tpu.pipeline_mode<synchronous>, transform_indices = @transform_2, window_bounds = array<i64: 1, 128>}, {pipeline_mode = #tpu.pipeline_mode<synchronous>, transform_indices = @transform_3, window_bounds = array<i64: 128, 128>}, {pipeline_mode = #tpu.pipeline_mode<synchronous>, transform_indices = @transform_4, window_bounds = array<i64: 1, 128>}, {transform_indices = @transform_5, window_bounds = array<i64: 8, 128>}]} {
    %c0 = arith.constant 0 : index
    %c0_0 = arith.constant 0 : index
    %0 = vector.load %arg1[%c0, %c0_0] : memref<8x128xf32, #tpu.memory_space<vmem>>, vector<8x128xf32>
    %cst = arith.constant 0.000000e+00 : f32
    %1 = vector.broadcast %cst : f32 to vector<8x128xf32>
    %c0_1 = arith.constant 0 : index
    %c0_2 = arith.constant 0 : index
    %2 = vector.load %arg2[%c0_1, %c0_2] : memref<128x128xf32, #tpu.memory_space<vmem>>, vector<128x128xf32>
    %cst_3 = arith.constant dense<0.000000e+00> : vector<8x128xf32>
    %3 = tpu.matmul %0, %2, %cst_3 {dimension_numbers = #tpu.dot_dimension_numbers<[1], [0], [0], [1], [0, 0, 1, 1], [], []>} : vector<8x128xf32>, vector<128x128xf32>, vector<8x128xf32> -> vector<8x128xf32>
    %c0_4 = arith.constant 0 : index
    %c0_5 = arith.constant 0 : index
    %4 = vector.load %arg3[%c0_4, %c0_5] : memref<1x128xf32, #tpu.memory_space<vmem>>, vector<1x128xf32>
    %5 = vector.broadcast %4 : vector<1x128xf32> to vector<8x128xf32>
    %6 = arith.addf %3, %5 : vector<8x128xf32>
    %cst_6 = arith.constant 0.000000e+00 : f32
    %7 = vector.broadcast %cst_6 : f32 to vector<8x128xf32>
    %8 = arith.maximumf %6, %7 : vector<8x128xf32>
    %c0_7 = arith.constant 0 : index
    %c0_8 = arith.constant 0 : index
    %9 = vector.load %arg4[%c0_7, %c0_8] : memref<128x128xf32, #tpu.memory_space<vmem>>, vector<128x128xf32>
    %cst_9 = arith.constant dense<0.000000e+00> : vector<8x128xf32>
    %10 = tpu.matmul %8, %9, %cst_9 {dimension_numbers = #tpu.dot_dimension_numbers<[1], [0], [0], [1], [0, 0, 1, 1], [], []>} : vector<8x128xf32>, vector<128x128xf32>, vector<8x128xf32> -> vector<8x128xf32>
    %11 = arith.addf %1, %10 : vector<8x128xf32>
    %c0_10 = arith.constant 0 : index
    %c0_11 = arith.constant 0 : index
    %12 = vector.load %arg5[%c0_10, %c0_11] : memref<1x128xf32, #tpu.memory_space<vmem>>, vector<1x128xf32>
    %13 = vector.broadcast %12 : vector<1x128xf32> to vector<8x128xf32>
    %14 = arith.addf %11, %13 : vector<8x128xf32>
    %c0_12 = arith.constant 0 : index
    %c0_13 = arith.constant 0 : index
    %15 = vector.load %arg6[%c0_12, %c0_13] : memref<8x128xf32, #tpu.memory_space<vmem>>, vector<8x128xf32>
    tpu.vector_store %arg6[%c0_12, %c0_13], %14 {strides = array<i32>} : memref<8x128xf32, #tpu.memory_space<vmem>>, vector<8x128xf32>,
    return
  }
  func.func @transform_0(%arg0: i32) -> (i32, i32) {
    %c0_i32 = arith.constant 0 : i32
    %c0_i32_0 = arith.constant 0 : i32
    return %arg0, %c0_i32 : i32, i32
  }
  func.func @transform_1(%arg0: i32) -> (i32, i32) {
    %c0_i32 = arith.constant 0 : i32
    %c0_i32_0 = arith.constant 0 : i32
    %c0_i32_1 = arith.constant 0 : i32
    return %c0_i32, %c0_i32_0 : i32, i32
  }
  func.func @transform_2(%arg0: i32) -> (i32, i32) {
    %c0_i32 = arith.constant 0 : i32
    %c0_i32_0 = arith.constant 0 : i32
    %c0_i32_1 = arith.constant 0 : i32
    return %c0_i32, %c0_i32_0 : i32, i32
  }
  func.func @transform_3(%arg0: i32) -> (i32, i32) {
    %c0_i32 = arith.constant 0 : i32
    %c0_i32_0 = arith.constant 0 : i32
    %c0_i32_1 = arith.constant 0 : i32
    return %c0_i32, %c0_i32_0 : i32, i32
  }
  func.func @transform_4(%arg0: i32) -> (i32, i32) {
    %c0_i32 = arith.constant 0 : i32
    %c0_i32_0 = arith.constant 0 : i32
    %c0_i32_1 = arith.constant 0 : i32
    return %c0_i32, %c0_i32_0 : i32, i32
  }
  func.func @transform_5(%arg0: i32) -> (i32, i32) {
    %c0_i32 = arith.constant 0 : i32
    %c0_i32_0 = arith.constant 0 : i32
    return %arg0, %c0_i32 : i32, i32
  }
}

</mosaic_0001>

<llo_original>
// kernel: mlp_forward_padded.1
$region0: #{mlp_forward_padded.1}
  #allocation0 [shape = 'u32[]', space=smem, size = 0x4, offset = 0x4, fixed_abs, tag = 'smem constant byte address 0x4 - core index']
  #allocation1 [shape = 'u32[144,128]{1,0:T(1,128)}', space=vmem, size = 0x12000, scoped, tag = 'internal scratch']
  %s0 = inlined_call_operand.vmem [shape: f32[8,128], index: 0, kind: input, shape index: {}]
  %s1 = inlined_call_operand.hbm [shape: f32[128,128], index: 1, kind: input, shape index: {}]
  %s2 = inlined_call_operand.vmem [shape: f32[1,128], index: 2, kind: input, shape index: {}]
  %s3 = inlined_call_operand.hbm [shape: f32[128,128], index: 3, kind: input, shape index: {}]
  %s4 = inlined_call_operand.vmem [shape: f32[1,128], index: 4, kind: input, shape index: {}]
  %s5 = inlined_call_operand.hbm [shape: f32[8,128], index: 5, kind: output, shape index: {}]
  %s6 = sld [smem:[#allocation0]]
  $region38: #{mlp_forward_padded.1} parent=0
    _
  %s8 = ssub.s32 1, %s6
  %s9 = scalar_select 0, %s8, %s6
  $region1: #{mlp_forward_padded.1} parent=0
    #allocation2 [shape = 'u8[65536]{0}', space=vmem, size = 0x10000, scoped, tag = 'input window, operand 1, single buffered']
    #allocation3 [shape = 's32[1]{0}', space=sflag, size = 0x4, scoped, tag = 'scoped memory for mlp_forward_padded.1']
    #allocation4 [shape = 's32[1]{0}', space=sflag, size = 0x4, scoped, tag = 'scoped memory for mlp_forward_padded.1']
    #allocation5 [shape = 'u8[65536]{0}', space=vmem, size = 0x10000, scoped, tag = 'input window, operand 3, single buffered']
    #allocation6 [shape = 's32[1]{0}', space=sflag, size = 0x4, scoped, tag = 'scoped memory for mlp_forward_padded.1']
    #allocation7 [shape = 'u8[4096]{0}', space=vmem, size = 0x1000, scoped, tag = 'output window, operand 0, single buffered']
    %10 = vsyncpa [#allocation3], 0
    %11 = vsyncpa [#allocation6], 0
    %12 = vsyncpa [#allocation4], 0
    // Predicated region
    $region2: #{mlp_forward_padded.1} parent=1 // pred_check
      _
    $region3: #{mlp_forward_padded.1} parent=1 // pred_check_branch
      %14 = sbr.rel (0) target = $region5
    $region4: #{mlp_forward_padded.1} parent=1 // pred_region
      _
    $region5: #{mlp_forward_padded.1} parent=1 // pred_fallthru
      _
    // Predicated region
    $region6: #{mlp_forward_padded.1} parent=1 // pred_check
      _
    $region7: #{mlp_forward_padded.1} parent=1 // pred_check_branch
      %16 = sbr.rel (0) target = $region9
    $region8: #{mlp_forward_padded.1} parent=1 // pred_region
      %s18 = ssub.s32 2048, 2048
      %19 = vsyncadd [#allocation3], %s18
      %s20 = sshll.u32 [#allocation2], 4
      %s21 = int_to_ptr.vmem [resolvable:$true] %s20
      %26 = dma.hbm_to_vmem [thread:$0]  %s1, 2048, %s21, [#allocation3], 128, 128, 8
    $region9: #{mlp_forward_padded.1} parent=1 // pred_fallthru
      _
    // Predicated region
    $region10: #{mlp_forward_padded.1} parent=1 // pred_check
      _
    $region11: #{mlp_forward_padded.1} parent=1 // pred_check_branch
      %28 = sbr.rel (0) target = $region13
    $region12: #{mlp_forward_padded.1} parent=1 // pred_region
      _
    $region13: #{mlp_forward_padded.1} parent=1 // pred_fallthru
      _
    // Predicated region
    $region14: #{mlp_forward_padded.1} parent=1 // pred_check
      _
    $region15: #{mlp_forward_padded.1} parent=1 // pred_check_branch
      %30 = sbr.rel (0) target = $region17
    $region16: #{mlp_forward_padded.1} parent=1 // pred_region
      %s32 = ssub.s32 2048, 2048
      %33 = vsyncadd [#allocation6], %s32
      %s34 = sshll.u32 [#allocation5], 4
      %s35 = int_to_ptr.vmem [resolvable:$true] %s34
      %40 = dma.hbm_to_vmem [thread:$0]  %s3, 2048, %s35, [#allocation6], 128, 128, 8
    $region17: #{mlp_forward_padded.1} parent=1 // pred_fallthru
      _
    // Predicated region
    $region18: #{mlp_forward_padded.1} parent=1 // pred_check
      _
    $region19: #{mlp_forward_padded.1} parent=1 // pred_check_branch
      %42 = sbr.rel (0) target = $region21
    $region20: #{mlp_forward_padded.1} parent=1 // pred_region
      _
    $region21: #{mlp_forward_padded.1} parent=1 // pred_fallthru
      _
    // Predicated region
    $region22: #{mlp_forward_padded.1} parent=1 // pred_check
      _
    $region23: #{mlp_forward_padded.1} parent=1 // pred_check_branch
      %44 = sbr.rel (0) target = $region25
    $region24: #{mlp_forward_padded.1} parent=1 // pred_region
      %45 = dma.done [#allocation3], 2048
    $region25: #{mlp_forward_padded.1} parent=1 // pred_fallthru
      _
    // Predicated region
    $region26: #{mlp_forward_padded.1} parent=1 // pred_check
      _
    $region27: #{mlp_forward_padded.1} parent=1 // pred_check_branch
      %47 = sbr.rel (0) target = $region29
    $region28: #{mlp_forward_padded.1} parent=1 // pred_region
      %48 = dma.done [#allocation6], 2048
    $region29: #{mlp_forward_padded.1} parent=1 // pred_fallthru
      _
    %v49 = vld [vmem:[%s0] sm:$0xff]
    %v50 = vld [vmem:[#allocation2] sm:$0xff]
    %v51 = vld [vmem:[#allocation2 + $0x8] sm:$0xff]
    %v52 = vld [vmem:[#allocation2 + $0x10] sm:$0xff]
    %v53 = vld [vmem:[#allocation2 + $0x18] sm:$0xff]
    %v54 = vld [vmem:[#allocation2 + $0x20] sm:$0xff]
    %v55 = vld [vmem:[#allocation2 + $0x28] sm:$0xff]
    %v56 = vld [vmem:[#allocation2 + $0x30] sm:$0xff]
    %v57 = vld [vmem:[#allocation2 + $0x38] sm:$0xff]
    %v58 = vld [vmem:[#allocation2 + $0x40] sm:$0xff]
    %v59 = vld [vmem:[#allocation2 + $0x48] sm:$0xff]
    %v60 = vld [vmem:[#allocation2 + $0x50] sm:$0xff]
    %v61 = vld [vmem:[#allocation2 + $0x58] sm:$0xff]
    %v62 = vld [vmem:[#allocation2 + $0x60] sm:$0xff]
    %v63 = vld [vmem:[#allocation2 + $0x68] sm:$0xff]
    %v64 = vld [vmem:[#allocation2 + $0x70] sm:$0xff]
    %v65 = vld [vmem:[#allocation2 + $0x78] sm:$0xff]
    %v66 = vld [vmem:[%s2] sm:$0x1]
    %v68 = vlaneseq
    %v69 = vshrl.u32 %v68, 7
    %v70 = vsub.s32 0, %v69
    %v71 = vrot.slane %v66, %v70
    %73 = vmatprep.subr.mxu0 0.0
    %74 = vmatpush1.msra.mxu0 %v65
    %75 = vmatprep.subr.mxu0 0.0
    %76 = vmatpush1.msra.mxu0 %v64
    %77 = vmatprep.subr.mxu0 0.0
    %78 = vmatpush1.msra.mxu0 %v63
    %79 = vmatprep.subr.mxu0 0.0
    %80 = vmatpush1.msra.mxu0 %v62
    %81 = vmatprep.subr.mxu0 0.0
    %82 = vmatpush1.msra.mxu0 %v61
    %83 = vmatprep.subr.mxu0 0.0
    %84 = vmatpush1.msra.mxu0 %v60
    %85 = vmatprep.subr.mxu0 0.0
    %86 = vmatpush1.msra.mxu0 %v59
    %87 = vmatprep.subr.mxu0 0.0
    %88 = vmatpush1.msra.mxu0 %v58
    %89 = vmatprep.subr.mxu0 0.0
    %90 = vmatpush1.msra.mxu0 %v57
    %91 = vmatprep.subr.mxu0 0.0
    %92 = vmatpush1.msra.mxu0 %v56
    %93 = vmatprep.subr.mxu0 0.0
    %94 = vmatpush1.msra.mxu0 %v55
    %95 = vmatprep.subr.mxu0 0.0
    %96 = vmatpush1.msra.mxu0 %v54
    %97 = vmatprep.subr.mxu0 0.0
    %98 = vmatpush1.msra.mxu0 %v53
    %99 = vmatprep.subr.mxu0 0.0
    %100 = vmatpush1.msra.mxu0 %v52
    %101 = vmatprep.subr.mxu0 0.0
    %102 = vmatpush1.msra.mxu0 %v51
    %103 = vmatprep.subr.mxu0 0.0
    %104 = vmatpush1.msra.mxu0 %v50
    %105 = vmatprep.subr.mxu0 0.0
    %106 = vmatpush2.msra.mxu0 0.0
    %107 = vmatprep.subr.mxu0 0.0
    %108 = vmatpush2.msra.mxu0 0.0
    %109 = vmatprep.subr.mxu0 0.0
    %110 = vmatpush2.msra.mxu0 0.0
    %111 = vmatprep.subr.mxu0 0.0
    %112 = vmatpush2.msra.mxu0 0.0
    %113 = vmatprep.subr.mxu0 0.0
    %114 = vmatpush2.msra.mxu0 0.0
    %115 = vmatprep.subr.mxu0 0.0
    %116 = vmatpush2.msra.mxu0 0.0
    %117 = vmatprep.subr.mxu0 0.0
    %118 = vmatpush2.msra.mxu0 0.0
    %119 = vmatprep.subr.mxu0 0.0
    %120 = vmatpush2.msra.mxu0 0.0
    %121 = vmatprep.subr.mxu0 0.0
    %122 = vmatpush2.msra.mxu0 0.0
    %123 = vmatprep.subr.mxu0 0.0
    %124 = vmatpush2.msra.mxu0 0.0
    %125 = vmatprep.subr.mxu0 0.0
    %126 = vmatpush2.msra.mxu0 0.0
    %127 = vmatprep.subr.mxu0 0.0
    %128 = vmatpush2.msra.mxu0 0.0
    %129 = vmatprep.subr.mxu0 0.0
    %130 = vmatpush2.msra.mxu0 0.0
    %131 = vmatprep.subr.mxu0 0.0
    %132 = vmatpush2.msra.mxu0 0.0
    %133 = vmatprep.subr.mxu0 0.0
    %134 = vmatpush2.msra.mxu0 0.0
    %135 = vmatprep.subr.mxu0 0.0
    %136 = vmatpush2.msra.mxu0 0.0
    %137 = vmatprep.mubr.f32.mxu0 0.0
    %138 = vmatmul.mubr.f32.gmra.mxu0 %v49
    %v139 = vpop.f32.mrf.mxu0
    %v140 = vadd.f32 %v71, %v139
    %v141 = vpop.f32.mrf.mxu0
    %142 = vdwg.mxu0
    %v143 = vmax.f32 %v140, 0.0
    %v144 = vld [vmem:[#allocation5] sm:$0xff]
    %v145 = vld [vmem:[#allocation5 + $0x8] sm:$0xff]
    %v146 = vld [vmem:[#allocation5 + $0x10] sm:$0xff]
    %v147 = vld [vmem:[#allocation5 + $0x18] sm:$0xff]
    %v148 = vld [vmem:[#allocation5 + $0x20] sm:$0xff]
    %v149 = vld [vmem:[#allocation5 + $0x28] sm:$0xff]
    %v150 = vld [vmem:[#allocation5 + $0x30] sm:$0xff]
    %v151 = vld [vmem:[#allocation5 + $0x38] sm:$0xff]
    %v152 = vld [vmem:[#allocation5 + $0x40] sm:$0xff]
    %v153 = vld [vmem:[#allocation5 + $0x48] sm:$0xff]
    %v154 = vld [vmem:[#allocation5 + $0x50] sm:$0xff]
    %v155 = vld [vmem:[#allocation5 + $0x58] sm:$0xff]
    %v156 = vld [vmem:[#allocation5 + $0x60] sm:$0xff]
    %v157 = vld [vmem:[#allocation5 + $0x68] sm:$0xff]
    %v158 = vld [vmem:[#allocation5 + $0x70] sm:$0xff]
    %v159 = vld [vmem:[#allocation5 + $0x78] sm:$0xff]
    %v160 = vld [vmem:[%s4] sm:$0x1]
    %v162 = vlaneseq
    %v163 = vshrl.u32 %v162, 7
    %v164 = vsub.s32 0, %v163
    %v165 = vrot.slane %v160, %v164
    %167 = vmatprep.subr.mxu0 0.0
    %168 = vmatpush1.msra.mxu0 %v159
    %169 = vmatprep.subr.mxu0 0.0
    %170 = vmatpush1.msra.mxu0 %v158
    %171 = vmatprep.subr.mxu0 0.0
    %172 = vmatpush1.msra.mxu0 %v157
    %173 = vmatprep.subr.mxu0 0.0
    %174 = vmatpush1.msra.mxu0 %v156
    %175 = vmatprep.subr.mxu0 0.0
    %176 = vmatpush1.msra.mxu0 %v155
    %177 = vmatprep.subr.mxu0 0.0
    %178 = vmatpush1.msra.mxu0 %v154
    %179 = vmatprep.subr.mxu0 0.0
    %180 = vmatpush1.msra.mxu0 %v153
    %181 = vmatprep.subr.mxu0 0.0
    %182 = vmatpush1.msra.mxu0 %v152
    %183 = vmatprep.subr.mxu0 0.0
    %184 = vmatpush1.msra.mxu0 %v151
    %185 = vmatprep.subr.mxu0 0.0
    %186 = vmatpush1.msra.mxu0 %v150
    %187 = vmatprep.subr.mxu0 0.0
    %188 = vmatpush1.msra.mxu0 %v149
    %189 = vmatprep.subr.mxu0 0.0
    %190 = vmatpush1.msra.mxu0 %v148
    %191 = vmatprep.subr.mxu0 0.0
    %192 = vmatpush1.msra.mxu0 %v147
    %193 = vmatprep.subr.mxu0 0.0
    %194 = vmatpush1.msra.mxu0 %v146
    %195 = vmatprep.subr.mxu0 0.0
    %196 = vmatpush1.msra.mxu0 %v145
    %197 = vmatprep.subr.mxu0 0.0
    %198 = vmatpush1.msra.mxu0 %v144
    %199 = vmatprep.subr.mxu0 0.0
    %200 = vmatpush2.msra.mxu0 0.0
    %201 = vmatprep.subr.mxu0 0.0
    %202 = vmatpush2.msra.mxu0 0.0
    %203 = vmatprep.subr.mxu0 0.0
    %204 = vmatpush2.msra.mxu0 0.0
    %205 = vmatprep.subr.mxu0 0.0
    %206 = vmatpush2.msra.mxu0 0.0
    %207 = vmatprep.subr.mxu0 0.0
    %208 = vmatpush2.msra.mxu0 0.0
    %209 = vmatprep.subr.mxu0 0.0
    %210 = vmatpush2.msra.mxu0 0.0
    %211 = vmatprep.subr.mxu0 0.0
    %212 = vmatpush2.msra.mxu0 0.0
    %213 = vmatprep.subr.mxu0 0.0
    %214 = vmatpush2.msra.mxu0 0.0
    %215 = vmatprep.subr.mxu0 0.0
    %216 = vmatpush2.msra.mxu0 0.0
    %217 = vmatprep.subr.mxu0 0.0
    %218 = vmatpush2.msra.mxu0 0.0
    %219 = vmatprep.subr.mxu0 0.0
    %220 = vmatpush2.msra.mxu0 0.0
    %221 = vmatprep.subr.mxu0 0.0
    %222 = vmatpush2.msra.mxu0 0.0
    %223 = vmatprep.subr.mxu0 0.0
    %224 = vmatpush2.msra.mxu0 0.0
    %225 = vmatprep.subr.mxu0 0.0
    %226 = vmatpush2.msra.mxu0 0.0
    %227 = vmatprep.subr.mxu0 0.0
    %228 = vmatpush2.msra.mxu0 0.0
    %229 = vmatprep.subr.mxu0 0.0
    %230 = vmatpush2.msra.mxu0 0.0
    %231 = vmatprep.mubr.f32.mxu0 0.0
    %232 = vmatmul.mubr.f32.gmra.mxu0 %v143
    %v233 = vpop.f32.mrf.mxu0
    %v234 = vadd.f32 %v165, %v233
    %v235 = vpop.f32.mrf.mxu0
    %236 = vdwg.mxu0
    %237 = vst [vmem:[#allocation7] sm:$0xff] %v234
    // Predicated region
    $region30: #{mlp_forward_padded.1} parent=1 // pred_check
      _
    $region31: #{mlp_forward_padded.1} parent=1 // pred_check_branch
      %239 = sbr.rel (0) target = $region33
    $region32: #{mlp_forward_padded.1} parent=1 // pred_region
      %s241 = ssub.s32 128, 128
      %242 = vsyncadd [#allocation4], %s241
      %s244 = sshll.u32 [#allocation7], 4
      %s245 = int_to_ptr.vmem [resolvable:$true] %s244
      %247 = dma.vmem_to_hbm [thread:$0]  %s245, 128, %s5, [#allocation4]
    $region33: #{mlp_forward_padded.1} parent=1 // pred_fallthru
      _
    // Predicated region
    $region34: #{mlp_forward_padded.1} parent=1 // pred_check
      _
    $region35: #{mlp_forward_padded.1} parent=1 // pred_check_branch
      %249 = sbr.rel (0) target = $region37
    $region36: #{mlp_forward_padded.1} parent=1 // pred_region
      %250 = dma.done [#allocation4], 128
    $region37: #{mlp_forward_padded.1} parent=1 // pred_fallthru
      _
    %251 = vsyncpa [#allocation3], 1
    %252 = vsyncpa [#allocation6], 1
    %253 = vsyncpa [#allocation4], 1

// kernel: mlp_forward_padded.1
$region0: #{mlp_forward_padded.1}
  #allocation0 [shape = 'u32[]', space=smem, size = 0x4, offset = 0x4, fixed_abs, tag = 'smem constant byte address 0x4 - core index']
  #allocation1 [shape = 'u32[144,128]{1,0:T(1,128)}', space=vmem, size = 0x12000, scoped, tag = 'internal scratch']
  %s0 = inlined_call_operand.vmem [shape: f32[8,128], index: 0, kind: input, shape index: {}]
  %s1 = inlined_call_operand.hbm [shape: f32[128,128], index: 1, kind: input, shape index: {}]
  %s2 = inlined_call_operand.vmem [shape: f32[1,128], index: 2, kind: input, shape index: {}]
  %s3 = inlined_call_operand.hbm [shape: f32[128,128], index: 3, kind: input, shape index: {}]
  %s4 = inlined_call_operand.vmem [shape: f32[1,128], index: 4, kind: input, shape index: {}]
  %s5 = inlined_call_operand.hbm [shape: f32[8,128], index: 5, kind: output, shape index: {}]
  %s6 = sld [smem:[#allocation0]]
  $region38: #{mlp_forward_padded.1} parent=0
    _
  %s8 = ssub.s32 1, %s6
  %s9 = scalar_select 0, %s8, %s6
  $region1: #{mlp_forward_padded.1} parent=0
    #allocation2 [shape = 'u8[65536]{0}', space=vmem, size = 0x10000, scoped, tag = 'input window, operand 1, single buffered']
    #allocation3 [shape = 's32[1]{0}', space=sflag, size = 0x4, scoped, tag = 'scoped memory for mlp_forward_padded.1']
    #allocation4 [shape = 's32[1]{0}', space=sflag, size = 0x4, scoped, tag = 'scoped memory for mlp_forward_padded.1']
    #allocation5 [shape = 'u8[65536]{0}', space=vmem, size = 0x10000, scoped, tag = 'input window, operand 3, single buffered']
    #allocation6 [shape = 's32[1]{0}', space=sflag, size = 0x4, scoped, tag = 'scoped memory for mlp_forward_padded.1']
    #allocation7 [shape = 'u8[4096]{0}', space=vmem, size = 0x1000, scoped, tag = 'output window, operand 0, single buffered']
    %10 = vsyncpa [#allocation3], 0
    %11 = vsyncpa [#allocation6], 0
    %12 = vsyncpa [#allocation4], 0
    // Predicated region
    $region2: #{mlp_forward_padded.1} parent=1 // pred_check
      _
    $region3: #{mlp_forward_padded.1} parent=1 // pred_check_branch
      %14 = sbr.rel (0) target = $region5
    $region4: #{mlp_forward_padded.1} parent=1 // pred_region
      _
    $region5: #{mlp_forward_padded.1} parent=1 // pred_fallthru
      _
    // Predicated region
    $region6: #{mlp_forward_padded.1} parent=1 // pred_check
      _
    $region7: #{mlp_forward_padded.1} parent=1 // pred_check_branch
      %16 = sbr.rel (0) target = $region9
    $region8: #{mlp_forward_padded.1} parent=1 // pred_region
      %s18 = ssub.s32 2048, 2048
      %19 = vsyncadd [#allocation3], %s18
      %s20 = sshll.u32 [#allocation2], 4
      %s21 = int_to_ptr.vmem [resolvable:$true] %s20
      %26 = dma.hbm_to_vmem [thread:$0]  %s1, 2048, %s21, [#allocation3], 128, 128, 8
    $region9: #{mlp_forward_padded.1} parent=1 // pred_fallthru
      _
    // Predicated region
    $region10: #{mlp_forward_padded.1} parent=1 // pred_check
      _
    $region11: #{mlp_forward_padded.1} parent=1 // pred_check_branch
      %28 = sbr.rel (0) target = $region13
    $region12: #{mlp_forward_padded.1} parent=1 // pred_region
      _
    $region13: #{mlp_forward_padded.1} parent=1 // pred_fallthru
      _
    // Predicated region
    $region14: #{mlp_forward_padded.1} parent=1 // pred_check
      _
    $region15: #{mlp_forward_padded.1} parent=1 // pred_check_branch
      %30 = sbr.rel (0) target = $region17
    $region16: #{mlp_forward_padded.1} parent=1 // pred_region
      %s32 = ssub.s32 2048, 2048
      %33 = vsyncadd [#allocation6], %s32
      %s34 = sshll.u32 [#allocation5], 4
      %s35 = int_to_ptr.vmem [resolvable:$true] %s34
      %40 = dma.hbm_to_vmem [thread:$0]  %s3, 2048, %s35, [#allocation6], 128, 128, 8
    $region17: #{mlp_forward_padded.1} parent=1 // pred_fallthru
      _
    // Predicated region
    $region18: #{mlp_forward_padded.1} parent=1 // pred_check
      _
    $region19: #{mlp_forward_padded.1} parent=1 // pred_check_branch
      %42 = sbr.rel (0) target = $region21
    $region20: #{mlp_forward_padded.1} parent=1 // pred_region
      _
    $region21: #{mlp_forward_padded.1} parent=1 // pred_fallthru
      _
    // Predicated region
    $region22: #{mlp_forward_padded.1} parent=1 // pred_check
      _
    $region23: #{mlp_forward_padded.1} parent=1 // pred_check_branch
      %44 = sbr.rel (0) target = $region25
    $region24: #{mlp_forward_padded.1} parent=1 // pred_region
      %45 = dma.done [#allocation3], 2048
    $region25: #{mlp_forward_padded.1} parent=1 // pred_fallthru
      _
    // Predicated region
    $region26: #{mlp_forward_padded.1} parent=1 // pred_check
      _
    $region27: #{mlp_forward_padded.1} parent=1 // pred_check_branch
      %47 = sbr.rel (0) target = $region29
    $region28: #{mlp_forward_padded.1} parent=1 // pred_region
      %48 = dma.done [#allocation6], 2048
    $region29: #{mlp_forward_padded.1} parent=1 // pred_fallthru
      _
    %v49 = vld [vmem:[%s0] sm:$0xff]
    %v50 = vld [vmem:[#allocation2] sm:$0xff]
    %v51 = vld [vmem:[#allocation2 + $0x8] sm:$0xff]
    %v52 = vld [vmem:[#allocation2 + $0x10] sm:$0xff]
    %v53 = vld [vmem:[#allocation2 + $0x18] sm:$0xff]
    %v54 = vld [vmem:[#allocation2 + $0x20] sm:$0xff]
    %v55 = vld [vmem:[#allocation2 + $0x28] sm:$0xff]
    %v56 = vld [vmem:[#allocation2 + $0x30] sm:$0xff]
    %v57 = vld [vmem:[#allocation2 + $0x38] sm:$0xff]
    %v58 = vld [vmem:[#allocation2 + $0x40] sm:$0xff]
    %v59 = vld [vmem:[#allocation2 + $0x48] sm:$0xff]
    %v60 = vld [vmem:[#allocation2 + $0x50] sm:$0xff]
    %v61 = vld [vmem:[#allocation2 + $0x58] sm:$0xff]
    %v62 = vld [vmem:[#allocation2 + $0x60] sm:$0xff]
    %v63 = vld [vmem:[#allocation2 + $0x68] sm:$0xff]
    %v64 = vld [vmem:[#allocation2 + $0x70] sm:$0xff]
    %v65 = vld [vmem:[#allocation2 + $0x78] sm:$0xff]
    %v66 = vld [vmem:[%s2] sm:$0x1]
    %v68 = vlaneseq
    %v69 = vshrl.u32 %v68, 7
    %v70 = vsub.s32 0, %v69
    %v71 = vrot.slane %v66, %v70
    %73 = vmatprep.subr.mxu0 0.0
    %74 = vmatpush1.msra.mxu0 %v65
    %75 = vmatprep.subr.mxu0 0.0
    %76 = vmatpush1.msra.mxu0 %v64
    %77 = vmatprep.subr.mxu0 0.0
    %78 = vmatpush1.msra.mxu0 %v63
    %79 = vmatprep.subr.mxu0 0.0
    %80 = vmatpush1.msra.mxu0 %v62
    %81 = vmatprep.subr.mxu0 0.0
    %82 = vmatpush1.msra.mxu0 %v61
    %83 = vmatprep.subr.mxu0 0.0
    %84 = vmatpush1.msra.mxu0 %v60
    %85 = vmatprep.subr.mxu0 0.0
    %86 = vmatpush1.msra.mxu0 %v59
    %87 = vmatprep.subr.mxu0 0.0
    %88 = vmatpush1.msra.mxu0 %v58
    %89 = vmatprep.subr.mxu0 0.0
    %90 = vmatpush1.msra.mxu0 %v57
    %91 = vmatprep.subr.mxu0 0.0
    %92 = vmatpush1.msra.mxu0 %v56
    %93 = vmatprep.subr.mxu0 0.0
    %94 = vmatpush1.msra.mxu0 %v55
    %95 = vmatprep.subr.mxu0 0.0
    %96 = vmatpush1.msra.mxu0 %v54
    %97 = vmatprep.subr.mxu0 0.0
    %98 = vmatpush1.msra.mxu0 %v53
    %99 = vmatprep.subr.mxu0 0.0
    %100 = vmatpush1.msra.mxu0 %v52
    %101 = vmatprep.subr.mxu0 0.0
    %102 = vmatpush1.msra.mxu0 %v51
    %103 = vmatprep.subr.mxu0 0.0
    %104 = vmatpush1.msra.mxu0 %v50
    %105 = vmatprep.subr.mxu0 0.0
    %106 = vmatpush2.msra.mxu0 0.0
    %107 = vmatprep.subr.mxu0 0.0
    %108 = vmatpush2.msra.mxu0 0.0
    %109 = vmatprep.subr.mxu0 0.0
    %110 = vmatpush2.msra.mxu0 0.0
    %111 = vmatprep.subr.mxu0 0.0
    %112 = vmatpush2.msra.mxu0 0.0
    %113 = vmatprep.subr.mxu0 0.0
    %114 = vmatpush2.msra.mxu0 0.0
    %115 = vmatprep.subr.mxu0 0.0
    %116 = vmatpush2.msra.mxu0 0.0
    %117 = vmatprep.subr.mxu0 0.0
    %118 = vmatpush2.msra.mxu0 0.0
    %119 = vmatprep.subr.mxu0 0.0
    %120 = vmatpush2.msra.mxu0 0.0
    %121 = vmatprep.subr.mxu0 0.0
    %122 = vmatpush2.msra.mxu0 0.0
    %123 = vmatprep.subr.mxu0 0.0
    %124 = vmatpush2.msra.mxu0 0.0
    %125 = vmatprep.subr.mxu0 0.0
    %126 = vmatpush2.msra.mxu0 0.0
    %127 = vmatprep.subr.mxu0 0.0
    %128 = vmatpush2.msra.mxu0 0.0
    %129 = vmatprep.subr.mxu0 0.0
    %130 = vmatpush2.msra.mxu0 0.0
    %131 = vmatprep.subr.mxu0 0.0
    %132 = vmatpush2.msra.mxu0 0.0
    %133 = vmatprep.subr.mxu0 0.0
    %134 = vmatpush2.msra.mxu0 0.0
    %135 = vmatprep.subr.mxu0 0.0
    %136 = vmatpush2.msra.mxu0 0.0
    %137 = vmatprep.mubr.f32.mxu0 0.0
    %138 = vmatmul.mubr.f32.gmra.mxu0 %v49
    %v139 = vpop.f32.mrf.mxu0
    %v140 = vadd.f32 %v71, %v139
    %v141 = vpop.f32.mrf.mxu0
    %142 = vdwg.mxu0
    %v143 = vmax.f32 %v140, 0.0
    %v144 = vld [vmem:[#allocation5] sm:$0xff]
    %v145 = vld [vmem:[#allocation5 + $0x8] sm:$0xff]
    %v146 = vld [vmem:[#allocation5 + $0x10] sm:$0xff]
    %v147 = vld [vmem:[#allocation5 + $0x18] sm:$0xff]
    %v148 = vld [vmem:[#allocation5 + $0x20] sm:$0xff]
    %v149 = vld [vmem:[#allocation5 + $0x28] sm:$0xff]
    %v150 = vld [vmem:[#allocation5 + $0x30] sm:$0xff]
    %v151 = vld [vmem:[#allocation5 + $0x38] sm:$0xff]
    %v152 = vld [vmem:[#allocation5 + $0x40] sm:$0xff]
    %v153 = vld [vmem:[#allocation5 + $0x48] sm:$0xff]
    %v154 = vld [vmem:[#allocation5 + $0x50] sm:$0xff]
    %v155 = vld [vmem:[#allocation5 + $0x58] sm:$0xff]
    %v156 = vld [vmem:[#allocation5 + $0x60] sm:$0xff]
    %v157 = vld [vmem:[#allocation5 + $0x68] sm:$0xff]
    %v158 = vld [vmem:[#allocation5 + $0x70] sm:$0xff]
    %v159 = vld [vmem:[#allocation5 + $0x78] sm:$0xff]
    %v160 = vld [vmem:[%s4] sm:$0x1]
    %v162 = vlaneseq
    %v163 = vshrl.u32 %v162, 7
    %v164 = vsub.s32 0, %v163
    %v165 = vrot.slane %v160, %v164
    %167 = vmatprep.subr.mxu0 0.0
    %168 = vmatpush1.msra.mxu0 %v159
    %169 = vmatprep.subr.mxu0 0.0
    %170 = vmatpush1.msra.mxu0 %v158
    %171 = vmatprep.subr.mxu0 0.0
    %172 = vmatpush1.msra.mxu0 %v157
    %173 = vmatprep.subr.mxu0 0.0
    %174 = vmatpush1.msra.mxu0 %v156
    %175 = vmatprep.subr.mxu0 0.0
    %176 = vmatpush1.msra.mxu0 %v155
    %177 = vmatprep.subr.mxu0 0.0
    %178 = vmatpush1.msra.mxu0 %v154
    %179 = vmatprep.subr.mxu0 0.0
    %180 = vmatpush1.msra.mxu0 %v153
    %181 = vmatprep.subr.mxu0 0.0
    %182 = vmatpush1.msra.mxu0 %v152
    %183 = vmatprep.subr.mxu0 0.0
    %184 = vmatpush1.msra.mxu0 %v151
    %185 = vmatprep.subr.mxu0 0.0
    %186 = vmatpush1.msra.mxu0 %v150
    %187 = vmatprep.subr.mxu0 0.0
    %188 = vmatpush1.msra.mxu0 %v149
    %189 = vmatprep.subr.mxu0 0.0
    %190 = vmatpush1.msra.mxu0 %v148
    %191 = vmatprep.subr.mxu0 0.0
    %192 = vmatpush1.msra.mxu0 %v147
    %193 = vmatprep.subr.mxu0 0.0
    %194 = vmatpush1.msra.mxu0 %v146
    %195 = vmatprep.subr.mxu0 0.0
    %196 = vmatpush1.msra.mxu0 %v145
    %197 = vmatprep.subr.mxu0 0.0
    %198 = vmatpush1.msra.mxu0 %v144
    %199 = vmatprep.subr.mxu0 0.0
    %200 = vmatpush2.msra.mxu0 0.0
    %201 = vmatprep.subr.mxu0 0.0
    %202 = vmatpush2.msra.mxu0 0.0
    %203 = vmatprep.subr.mxu0 0.0
    %204 = vmatpush2.msra.mxu0 0.0
    %205 = vmatprep.subr.mxu0 0.0
    %206 = vmatpush2.msra.mxu0 0.0
    %207 = vmatprep.subr.mxu0 0.0
    %208 = vmatpush2.msra.mxu0 0.0
    %209 = vmatprep.subr.mxu0 0.0
    %210 = vmatpush2.msra.mxu0 0.0
    %211 = vmatprep.subr.mxu0 0.0
    %212 = vmatpush2.msra.mxu0 0.0
    %213 = vmatprep.subr.mxu0 0.0
    %214 = vmatpush2.msra.mxu0 0.0
    %215 = vmatprep.subr.mxu0 0.0
    %216 = vmatpush2.msra.mxu0 0.0
    %217 = vmatprep.subr.mxu0 0.0
    %218 = vmatpush2.msra.mxu0 0.0
    %219 = vmatprep.subr.mxu0 0.0
    %220 = vmatpush2.msra.mxu0 0.0
    %221 = vmatprep.subr.mxu0 0.0
    %222 = vmatpush2.msra.mxu0 0.0
    %223 = vmatprep.subr.mxu0 0.0
    %224 = vmatpush2.msra.mxu0 0.0
    %225 = vmatprep.subr.mxu0 0.0
    %226 = vmatpush2.msra.mxu0 0.0
    %227 = vmatprep.subr.mxu0 0.0
    %228 = vmatpush2.msra.mxu0 0.0
    %229 = vmatprep.subr.mxu0 0.0
    %230 = vmatpush2.msra.mxu0 0.0
    %231 = vmatprep.mubr.f32.mxu0 0.0
    %232 = vmatmul.mubr.f32.gmra.mxu0 %v143
    %v233 = vpop.f32.mrf.mxu0
    %v234 = vadd.f32 %v165, %v233
    %v235 = vpop.f32.mrf.mxu0
    %236 = vdwg.mxu0
    %237 = vst [vmem:[#allocation7] sm:$0xff] %v234
    // Predicated region
    $region30: #{mlp_forward_padded.1} parent=1 // pred_check
      _
    $region31: #{mlp_forward_padded.1} parent=1 // pred_check_branch
      %239 = sbr.rel (0) target = $region33
    $region32: #{mlp_forward_padded.1} parent=1 // pred_region
      %s241 = ssub.s32 128, 128
      %242 = vsyncadd [#allocation4], %s241
      %s244 = sshll.u32 [#allocation7], 4
      %s245 = int_to_ptr.vmem [resolvable:$true] %s244
      %247 = dma.vmem_to_hbm [thread:$0]  %s245, 128, %s5, [#allocation4]
    $region33: #{mlp_forward_padded.1} parent=1 // pred_fallthru
      _
    // Predicated region
    $region34: #{mlp_forward_padded.1} parent=1 // pred_check
      _
    $region35: #{mlp_forward_padded.1} parent=1 // pred_check_branch
      %249 = sbr.rel (0) target = $region37
    $region36: #{mlp_forward_padded.1} parent=1 // pred_region
      %250 = dma.done [#allocation4], 128
    $region37: #{mlp_forward_padded.1} parent=1 // pred_fallthru
      _
    %251 = vsyncpa [#allocation3], 1
    %252 = vsyncpa [#allocation6], 1
    %253 = vsyncpa [#allocation4], 1

</llo_original>
